<compile_context>
chip_gen: v5e
topology: v5e:2x2
jax: 0.10.0
libtpu: 0.0.40
codegen_flags: <defaults>
</compile_context>

<pallas_src>
import jax
import jax.numpy as jnp
from jax.experimental import pallas as pl
from jax.experimental.pallas import tpu as pltpu

# keep the pure-JAX reference matmuls at full f32 so it matches the HIGHEST-precision kernel dots
jax.config.update("jax_default_matmul_precision", "highest")

CLASS_TOTAL = 2
HIDDEN_UNITS = 32
SEQ_LEN = 15
NUM_NODES = 3
NODE_FEATURES = 4

PAD_T = 16                                   # SEQ_LEN padded to a 2-sublane-tile per-node block
ROWS = NUM_NODES * PAD_T                     # 48 node-stacked rows
LANES = 2 * HIDDEN_UNITS                     # 64-lane fused z|h width

# packed parameter slab row offsets (all 8-aligned)
_R_WPROJ = 0                                 # (64, 64) input projection (rows >= F are zero)
_R_WL = _R_WPROJ + LANES                     # 64  : (2H, 2H) block-diagonal gate weight
_R_BG = _R_WL + LANES                        # 128 : (48, 2H) graph-conv bias slab (pad rows zero)
_R_BL = _R_BG + ROWS                         # 176 : (48, 2H) gate bias slab (pad rows zero)
_R_HEAD = _R_BL + ROWS                       # 224 : (N*C, 2H) head weights + (C, 2H) head bias
PARAM_ROWS = _R_HEAD + NUM_NODES * CLASS_TOTAL + CLASS_TOTAL   # 232


def stgcn_kernel(data_ref, par_ref, out_ref):
    N, H, C, T, F = NUM_NODES, HIDDEN_UNITS, CLASS_TOTAL, SEQ_LEN, NODE_FEATURES
    hi = jax.lax.Precision.HIGHEST

    data = data_ref[...]                            # (48, 64): lanes 0..3 = x, 4..6 = A, rest 0
    wproj = par_ref[_R_WPROJ:_R_WL, :]              # (64, 64)
    wl = par_ref[_R_WL:_R_BG, :]                    # (64, 64) blockdiag(lzw, lhw)
    bg = par_ref[_R_BG:_R_BL, :]                    # (48, 64) [bz|bh], zero at padded rows
    bl = par_ref[_R_BL:_R_HEAD, :]                  # (48, 64) [lzb|lhb], zero at padded rows
    tail = par_ref[_R_HEAD:PARAM_ROWS, :]           # (8, 64)  head weights + head bias

    # ---- fused (z|h) input projection: one MXU pass on the node-stacked slab ----
    xw = jnp.dot(data, wproj, preferred_element_type=jnp.float32, precision=hi)   # (48, 64)

    # ---- gcn_norm coefficients from the adjacency lanes ----
    A = [data[s * PAD_T:(s + 1) * PAD_T, F:F + N] for s in range(N)]   # A[s][t, tgt], (16, 3)
    deg = (A[0] + A[1]) + A[2]                                         # target in-degree (16, 3)
    dis = jnp.where(deg > 0, jax.lax.rsqrt(deg), 0.0)                  # D^{-1/2}, 0 for isolated
    Ahat = [dis[:, s:s + 1] * A[s] * dis for s in range(N)]            # D^-1/2 A D^-1/2

    # ---- adjacency aggregation: 9 FMAs on (16, 64) blocks, short add trees (ILP) ----
    xwb = [xw[s * PAD_T:(s + 1) * PAD_T, :] for s in range(N)]
    conv = []
    for j in range(N):                                                 # target node j
        t0 = Ahat[0][:, j:j + 1] * xwb[0]
        t1 = Ahat[1][:, j:j + 1] * xwb[1]
        t2 = Ahat[2][:, j:j + 1] * xwb[2]
        conv.append((t0 + t1) + t2)
    conv_all = jnp.concatenate(conv, axis=0) + bg                      # (48, 64); pad rows stay 0

    # ---- fused (z|h) gate linear: one MXU pass against blockdiag(lzw, lhw) ----
    pre = jnp.dot(conv_all, wl, preferred_element_type=jnp.float32, precision=hi) + bl  # (48, 64)

    z = jax.nn.sigmoid(pre[:, :H])                  # update gate
    ht = jnp.tanh(pre[:, H:])                       # candidate state
    # reset gate omitted: hidden state is zero every step, so H_prev * R == 0
    hr = jnp.maximum((1.0 - z) * ht, 0.0)           # (48, 32); padded rows are exactly 0

    # ---- per-node time sums + linear head (one lane reduce) ----
    acc = None
    for j in range(N):
        ts = jnp.sum(hr[j * PAD_T:(j + 1) * PAD_T, :], axis=0, keepdims=True)   # (1, 32)
        w3j = tail[j * C:(j + 1) * C, :H]                                        # (C, 32)
        acc = ts * w3j if acc is None else acc + ts * w3j
    head = jnp.sum(acc, axis=1, keepdims=True)      # (C, 1)
    fb = tail[N * C:N * C + C, 0:1]                 # (C, 1)
    out_ref[...] = head * (1.0 / T) + fb            # y = mean_t(...) @ W_lin.T + b


def pack_params(params):
    """One-time parameter packing into a single lane-dense (232, 64) slab (hoisted off the
    per-call path).  All blocks are 64 lanes wide; bias slabs are pre-masked at padded rows."""
    F, H, C, N, T = NODE_FEATURES, HIDDEN_UNITS, CLASS_TOTAL, NUM_NODES, SEQ_LEN

    # (64, 64) fused z|h projection weight; rows >= F zero so A/pad lanes drop out of the dot
    wproj = jnp.zeros((LANES, 2 * H), jnp.float32)
    wproj = wproj.at[:F, :H].set(params['wz'])
    wproj = wproj.at[:F, H:].set(params['wh'])

    # (2H, 2H) block-diagonal gate weight: blockdiag(lzw[:, :H].T, lhw[:, :H].T)
    wl = jnp.zeros((2 * H, 2 * H), jnp.float32)
    wl = wl.at[:H, :H].set(params['lzw'][:, :H].T)
    wl = wl.at[H:, H:].set(params['lhw'][:, :H].T)

    # bias slabs over node-stacked, time-padded rows; zero at padded rows
    row_valid = (jnp.arange(ROWS) % PAD_T) < T
    bg = jnp.where(row_valid[:, None],
                   jnp.concatenate([params['bz'], params['bh']], axis=1), 0.0)   # (48, 2H)
    bl = jnp.where(row_valid[:, None],
                   jnp.concatenate([params['lzb'], params['lhb']], axis=1), 0.0)

    # head: w3[n, c, h] = W_lin[c, h*N + n]  (torch flattens hid-major)
    w3 = jnp.transpose(params['linw'].reshape(C, H, N), (2, 0, 1))                # (N, C, H)
    head = jnp.zeros((N * C, 2 * H), jnp.float32).at[:, :H].set(w3.reshape(N * C, H))
    fb = jnp.zeros((C, 2 * H), jnp.float32).at[:, 0].set(params['linb'][0])

    return jnp.concatenate([wproj, wl, bg, bl, head, fb], axis=0)                 # (232, 64)


@jax.jit
def stgcn_pallas(x, edge_weight, packed_params):
    """Per-call path: only the (x, A) data-slab layout plumbing plus the pallas_call."""
    T, N, F = SEQ_LEN, NUM_NODES, NODE_FEATURES
    x = x.astype(jnp.float32)
    a = edge_weight.astype(jnp.float32).reshape(T, N, N)                # A[t, src, tgt]

    # node-major, time-padded (48, 64) data slab: lanes 0..3 = features, lanes 4..6 = A row
    blk = jnp.concatenate([jnp.transpose(x, (1, 0, 2)),                 # (N, T, F)
                           jnp.transpose(a, (1, 0, 2))], axis=2)        # (N, T, F+N)
    blk = jnp.pad(blk, ((0, 0), (0, PAD_T - T), (0, LANES - (F + N))))  # (N, 16, 64)
    data = blk.reshape(ROWS, LANES)

    out = pl.pallas_call(
        stgcn_kernel,
        out_shape=jax.ShapeDtypeStruct((CLASS_TOTAL, 1), jnp.float32),
        in_specs=[pl.BlockSpec(memory_space=pltpu.MemorySpace.VMEM)] * 2,
        out_specs=pl.BlockSpec(memory_space=pltpu.MemorySpace.VMEM),
    )(data, packed_params)
    return out[:, 0]                                                    # (CLASS_TOTAL,)


def stgcn_reference(x, edge_weight, params):
    """Pure-JAX replica of the PyTorch forward (including the no-op reset gate)."""
    T, N, _ = x.shape
    H = HIDDEN_UNITS
    A = edge_weight.reshape(T, N, N)
    feats = []
    for t in range(T):
        At = A[t]
        deg = At.sum(axis=0)
        dis = jnp.where(deg > 0, deg ** -0.5, 0.0)
        Ahat = dis[:, None] * At * dis[None, :]
        P = Ahat.T                                          # aggregate sources at targets

        def gcn(w, b):
            return P @ (x[t] @ w) + b[0]

        Hprev = jnp.zeros((N, H), jnp.float32)
        Z = jax.nn.sigmoid(jnp.concatenate([gcn(params['wz'], params['bz']), Hprev], 1)
                           @ params['lzw'].T + params['lzb'][0])
        R = jax.nn.sigmoid(jnp.concatenate([gcn(params['wr'], params['br']), Hprev], 1)
                           @ params['lrw'].T + params['lrb'][0])
        Htilde = jnp.tanh(jnp.concatenate([gcn(params['wh'], params['bh']), Hprev * R], 1)
                          @ params['lhw'].T + params['lhb'][0])
        Hnew = Z * Hprev + (1.0 - Z) * Htilde
        h = jnp.maximum(Hnew, 0.0)
        feats.append(h.T.reshape(-1))                       # flatten hid-major, like torch
    out = jnp.stack(feats)                                  # (T, 3H)
    feat = out.mean(axis=0)                                 # AvgPool1d(SEQ_LEN)
    return feat @ params['linw'].T + params['linb'][0]      # (CLASS_TOTAL,)


def make_params(key):
    ks = jax.random.split(key, 14)

    def rn(k, shape, s=0.2):
        return jax.random.normal(k, shape, jnp.float32) * s

    F, H = NODE_FEATURES, HIDDEN_UNITS
    return {
        'wz': rn(ks[0], (F, H)),  'bz': rn(ks[1], (1, H)),
        'wr': rn(ks[2], (F, H)),  'br': rn(ks[3], (1, H)),
        'wh': rn(ks[4], (F, H)),  'bh': rn(ks[5], (1, H)),
        'lzw': rn(ks[6], (H, 2 * H)),  'lzb': rn(ks[7], (1, H)),
        'lrw': rn(ks[8], (H, 2 * H)),  'lrb': rn(ks[9], (1, H)),
        'lhw': rn(ks[10], (H, 2 * H)), 'lhb': rn(ks[11], (1, H)),
        'linw': rn(ks[12], (CLASS_TOTAL, 3 * H)), 'linb': rn(ks[13], (1, CLASS_TOTAL)),
    }


if __name__ == "__main__":
    key = jax.random.PRNGKey(0)
    kx, kw, kp = jax.random.split(key, 3)

    x = jax.random.normal(kx, (SEQ_LEN, NUM_NODES, NODE_FEATURES), jnp.float32)
    # positive edge weights so GCN degrees are well-defined
    edge_weight = jax.random.uniform(kw, (SEQ_LEN, NUM_NODES * NUM_NODES),
                                     jnp.float32, minval=0.5, maxval=1.5)
    params = make_params(kp)

    packed = pack_params(params)            # one-time packing, outside the per-call jit path
    packed = jax.block_until_ready(packed)

    y = stgcn_pallas(x, edge_weight, packed)
    y = jax.block_until_ready(y)

    y_ref = stgcn_reference(x, edge_weight, params)
    assert y.shape == (CLASS_TOTAL,)
    assert jnp.allclose(y, y_ref, atol=1e-4, rtol=1e-4), (y, y_ref)

    print("KERNEL_OK")
</pallas_src>

<mosaic_0001>
module attributes {stable_mosaic.version = 11 : i64} {
  func.func @stgcn_kernel(%arg0: memref<48x64xf32, #tpu.memory_space<vmem>>, %arg1: memref<232x64xf32, #tpu.memory_space<vmem>>, %arg2: memref<2x1xf32, #tpu.memory_space<vmem>>) attributes {dimension_semantics = [], scalar_prefetch = 0 : i64, scratch_operands = 0 : i64, tpu.core_type = #tpu.core_type<tc>} {
    %c0 = arith.constant 0 : index
    %c0_0 = arith.constant 0 : index
    %0 = vector.load %arg0[%c0, %c0_0] : memref<48x64xf32, #tpu.memory_space<vmem>>, vector<48x64xf32>
    %c0_1 = arith.constant 0 : index
    %c0_2 = arith.constant 0 : index
    %1 = vector.load %arg1[%c0_1, %c0_2] : memref<232x64xf32, #tpu.memory_space<vmem>>, vector<64x64xf32>
    %c64 = arith.constant 64 : index
    %c0_3 = arith.constant 0 : index
    %2 = vector.load %arg1[%c64, %c0_3] : memref<232x64xf32, #tpu.memory_space<vmem>>, vector<64x64xf32>
    %c128 = arith.constant 128 : index
    %c0_4 = arith.constant 0 : index
    %3 = vector.load %arg1[%c128, %c0_4] : memref<232x64xf32, #tpu.memory_space<vmem>>, vector<48x64xf32>
    %c176 = arith.constant 176 : index
    %c0_5 = arith.constant 0 : index
    %4 = vector.load %arg1[%c176, %c0_5] : memref<232x64xf32, #tpu.memory_space<vmem>>, vector<48x64xf32>
    %c224 = arith.constant 224 : index
    %c0_6 = arith.constant 0 : index
    %5 = vector.load %arg1[%c224, %c0_6] : memref<232x64xf32, #tpu.memory_space<vmem>>, vector<8x64xf32>
    %cst = arith.constant dense<0.000000e+00> : vector<48x64xf32>
    %6 = tpu.matmul %0, %1, %cst {dimension_numbers = #tpu.dot_dimension_numbers<[1], [0], [0], [1], [0, 0, 1, 1], [], []>, precision = #tpu.contract_precision<fp32>} : vector<48x64xf32>, vector<64x64xf32>, vector<48x64xf32> -> vector<48x64xf32>
    %7 = vector.extract_strided_slice %0 {offsets = [0, 4], sizes = [16, 3], strides = [1, 1]} : vector<48x64xf32> to vector<16x3xf32>
    %8 = vector.extract_strided_slice %0 {offsets = [16, 4], sizes = [16, 3], strides = [1, 1]} : vector<48x64xf32> to vector<16x3xf32>
    %9 = vector.extract_strided_slice %0 {offsets = [32, 4], sizes = [16, 3], strides = [1, 1]} : vector<48x64xf32> to vector<16x3xf32>
    %10 = arith.addf %7, %8 : vector<16x3xf32>
    %11 = arith.addf %10, %9 : vector<16x3xf32>
    %cst_7 = arith.constant 0.000000e+00 : f32
    %12 = vector.broadcast %cst_7 : f32 to vector<16x3xf32>
    %13 = arith.cmpf ogt, %11, %12 : vector<16x3xf32>
    %14 = math.rsqrt %11 : vector<16x3xf32>
    %cst_8 = arith.constant 0.000000e+00 : f32
    %15 = vector.broadcast %cst_8 : f32 to vector<16x3xf32>
    %16 = arith.select %13, %14, %15 : vector<16x3xi1>, vector<16x3xf32>
    %17 = vector.extract_strided_slice %16 {offsets = [0, 0], sizes = [16, 1], strides = [1, 1]} : vector<16x3xf32> to vector<16x1xf32>
    %18 = vector.broadcast %17 : vector<16x1xf32> to vector<16x3xf32>
    %19 = arith.mulf %18, %7 : vector<16x3xf32>
    %20 = arith.mulf %19, %16 : vector<16x3xf32>
    %21 = vector.extract_strided_slice %16 {offsets = [0, 1], sizes = [16, 1], strides = [1, 1]} : vector<16x3xf32> to vector<16x1xf32>
    %22 = vector.broadcast %21 : vector<16x1xf32> to vector<16x3xf32>
    %23 = arith.mulf %22, %8 : vector<16x3xf32>
    %24 = arith.mulf %23, %16 : vector<16x3xf32>
    %25 = vector.extract_strided_slice %16 {offsets = [0, 2], sizes = [16, 1], strides = [1, 1]} : vector<16x3xf32> to vector<16x1xf32>
    %26 = vector.broadcast %25 : vector<16x1xf32> to vector<16x3xf32>
    %27 = arith.mulf %26, %9 : vector<16x3xf32>
    %28 = arith.mulf %27, %16 : vector<16x3xf32>
    %29 = vector.extract_strided_slice %6 {offsets = [0, 0], sizes = [16, 64], strides = [1, 1]} : vector<48x64xf32> to vector<16x64xf32>
    %30 = vector.extract_strided_slice %6 {offsets = [16, 0], sizes = [16, 64], strides = [1, 1]} : vector<48x64xf32> to vector<16x64xf32>
    %31 = vector.extract_strided_slice %6 {offsets = [32, 0], sizes = [16, 64], strides = [1, 1]} : vector<48x64xf32> to vector<16x64xf32>
    %32 = vector.extract_strided_slice %20 {offsets = [0, 0], sizes = [16, 1], strides = [1, 1]} : vector<16x3xf32> to vector<16x1xf32>
    %33 = vector.broadcast %32 : vector<16x1xf32> to vector<16x64xf32>
    %34 = arith.mulf %33, %29 : vector<16x64xf32>
    %35 = vector.extract_strided_slice %24 {offsets = [0, 0], sizes = [16, 1], strides = [1, 1]} : vector<16x3xf32> to vector<16x1xf32>
    %36 = vector.broadcast %35 : vector<16x1xf32> to vector<16x64xf32>
    %37 = arith.mulf %36, %30 : vector<16x64xf32>
    %38 = vector.extract_strided_slice %28 {offsets = [0, 0], sizes = [16, 1], strides = [1, 1]} : vector<16x3xf32> to vector<16x1xf32>
    %39 = vector.broadcast %38 : vector<16x1xf32> to vector<16x64xf32>
    %40 = arith.mulf %39, %31 : vector<16x64xf32>
    %41 = arith.addf %34, %37 : vector<16x64xf32>
    %42 = arith.addf %41, %40 : vector<16x64xf32>
    %43 = vector.extract_strided_slice %20 {offsets = [0, 1], sizes = [16, 1], strides = [1, 1]} : vector<16x3xf32> to vector<16x1xf32>
    %44 = vector.broadcast %43 : vector<16x1xf32> to vector<16x64xf32>
    %45 = arith.mulf %44, %29 : vector<16x64xf32>
    %46 = vector.extract_strided_slice %24 {offsets = [0, 1], sizes = [16, 1], strides = [1, 1]} : vector<16x3xf32> to vector<16x1xf32>
    %47 = vector.broadcast %46 : vector<16x1xf32> to vector<16x64xf32>
    %48 = arith.mulf %47, %30 : vector<16x64xf32>
    %49 = vector.extract_strided_slice %28 {offsets = [0, 1], sizes = [16, 1], strides = [1, 1]} : vector<16x3xf32> to vector<16x1xf32>
    %50 = vector.broadcast %49 : vector<16x1xf32> to vector<16x64xf32>
    %51 = arith.mulf %50, %31 : vector<16x64xf32>
    %52 = arith.addf %45, %48 : vector<16x64xf32>
    %53 = arith.addf %52, %51 : vector<16x64xf32>
    %54 = vector.extract_strided_slice %20 {offsets = [0, 2], sizes = [16, 1], strides = [1, 1]} : vector<16x3xf32> to vector<16x1xf32>
    %55 = vector.broadcast %54 : vector<16x1xf32> to vector<16x64xf32>
    %56 = arith.mulf %55, %29 : vector<16x64xf32>
    %57 = vector.extract_strided_slice %24 {offsets = [0, 2], sizes = [16, 1], strides = [1, 1]} : vector<16x3xf32> to vector<16x1xf32>
    %58 = vector.broadcast %57 : vector<16x1xf32> to vector<16x64xf32>
    %59 = arith.mulf %58, %30 : vector<16x64xf32>
    %60 = vector.extract_strided_slice %28 {offsets = [0, 2], sizes = [16, 1], strides = [1, 1]} : vector<16x3xf32> to vector<16x1xf32>
    %61 = vector.broadcast %60 : vector<16x1xf32> to vector<16x64xf32>
    %62 = arith.mulf %61, %31 : vector<16x64xf32>
    %63 = arith.addf %56, %59 : vector<16x64xf32>
    %64 = arith.addf %63, %62 : vector<16x64xf32>
    %65 = tpu.concatenate %42, %53, %64 in 0 : vector<16x64xf32>, vector<16x64xf32>, vector<16x64xf32> -> vector<48x64xf32>
    %66 = arith.addf %65, %3 : vector<48x64xf32>
    %cst_9 = arith.constant dense<0.000000e+00> : vector<48x64xf32>
    %67 = tpu.matmul %66, %2, %cst_9 {dimension_numbers = #tpu.dot_dimension_numbers<[1], [0], [0], [1], [0, 0, 1, 1], [], []>, precision = #tpu.contract_precision<fp32>} : vector<48x64xf32>, vector<64x64xf32>, vector<48x64xf32> -> vector<48x64xf32>
    %68 = arith.addf %67, %4 : vector<48x64xf32>
    %69 = vector.extract_strided_slice %68 {offsets = [0, 0], sizes = [48, 32], strides = [1, 1]} : vector<48x64xf32> to vector<48x32xf32>
    %70 = arith.negf %69 : vector<48x32xf32>
    %71 = math.exp %70 : vector<48x32xf32>
    %cst_10 = arith.constant 1.000000e+00 : f32
    %72 = vector.broadcast %cst_10 : f32 to vector<48x32xf32>
    %73 = arith.addf %72, %71 : vector<48x32xf32>
    %74 = arith.divf %72, %73 : vector<48x32xf32>
    %75 = vector.extract_strided_slice %68 {offsets = [0, 32], sizes = [48, 32], strides = [1, 1]} : vector<48x64xf32> to vector<48x32xf32>
    %76 = math.tanh %75 : vector<48x32xf32>
    %cst_11 = arith.constant 1.000000e+00 : f32
    %77 = vector.broadcast %cst_11 : f32 to vector<48x32xf32>
    %78 = arith.subf %77, %74 : vector<48x32xf32>
    %79 = arith.mulf %78, %76 : vector<48x32xf32>
    %cst_12 = arith.constant 0.000000e+00 : f32
    %80 = vector.broadcast %cst_12 : f32 to vector<48x32xf32>
    %81 = arith.maximumf %79, %80 : vector<48x32xf32>
    %82 = vector.extract_strided_slice %81 {offsets = [0, 0], sizes = [16, 32], strides = [1, 1]} : vector<48x32xf32> to vector<16x32xf32>
    %cst_13 = arith.constant dense<0.000000e+00> : vector<32xf32>
    %83 = vector.multi_reduction <add>, %82, %cst_13 [0] : vector<16x32xf32> to vector<32xf32>
    %84 = vector.shape_cast %83 : vector<32xf32> to vector<1x32xf32>
    %85 = vector.extract_strided_slice %5 {offsets = [0, 0], sizes = [2, 32], strides = [1, 1]} : vector<8x64xf32> to vector<2x32xf32>
    %86 = vector.broadcast %84 : vector<1x32xf32> to vector<2x32xf32>
    %87 = arith.mulf %86, %85 : vector<2x32xf32>
    %88 = vector.extract_strided_slice %81 {offsets = [16, 0], sizes = [16, 32], strides = [1, 1]} : vector<48x32xf32> to vector<16x32xf32>
    %cst_14 = arith.constant dense<0.000000e+00> : vector<32xf32>
    %89 = vector.multi_reduction <add>, %88, %cst_14 [0] : vector<16x32xf32> to vector<32xf32>
    %90 = vector.shape_cast %89 : vector<32xf32> to vector<1x32xf32>
    %91 = vector.extract_strided_slice %5 {offsets = [2, 0], sizes = [2, 32], strides = [1, 1]} : vector<8x64xf32> to vector<2x32xf32>
    %92 = vector.broadcast %90 : vector<1x32xf32> to vector<2x32xf32>
    %93 = arith.mulf %92, %91 : vector<2x32xf32>
    %94 = arith.addf %87, %93 : vector<2x32xf32>
    %95 = vector.extract_strided_slice %81 {offsets = [32, 0], sizes = [16, 32], strides = [1, 1]} : vector<48x32xf32> to vector<16x32xf32>
    %cst_15 = arith.constant dense<0.000000e+00> : vector<32xf32>
    %96 = vector.multi_reduction <add>, %95, %cst_15 [0] : vector<16x32xf32> to vector<32xf32>
    %97 = vector.shape_cast %96 : vector<32xf32> to vector<1x32xf32>
    %98 = vector.extract_strided_slice %5 {offsets = [4, 0], sizes = [2, 32], strides = [1, 1]} : vector<8x64xf32> to vector<2x32xf32>
    %99 = vector.broadcast %97 : vector<1x32xf32> to vector<2x32xf32>
    %100 = arith.mulf %99, %98 : vector<2x32xf32>
    %101 = arith.addf %94, %100 : vector<2x32xf32>
    %cst_16 = arith.constant dense<0.000000e+00> : vector<2xf32>
    %102 = vector.multi_reduction <add>, %101, %cst_16 [1] : vector<2x32xf32> to vector<2xf32>
    %103 = vector.shape_cast %102 : vector<2xf32> to vector<2x1xf32>
    %104 = vector.extract_strided_slice %5 {offsets = [6, 0], sizes = [2, 1], strides = [1, 1]} : vector<8x64xf32> to vector<2x1xf32>
    %cst_17 = arith.constant 0.0666666701 : f32
    %105 = vector.broadcast %cst_17 : f32 to vector<2x1xf32>
    %106 = arith.mulf %103, %105 : vector<2x1xf32>
    %107 = arith.addf %106, %104 : vector<2x1xf32>
    %c0_18 = arith.constant 0 : index
    %c0_19 = arith.constant 0 : index
    %108 = vector.load %arg2[%c0_18, %c0_19] : memref<2x1xf32, #tpu.memory_space<vmem>>, vector<2x1xf32>
    tpu.vector_store %arg2[%c0_18, %c0_19], %107 {strides = array<i32>} : memref<2x1xf32, #tpu.memory_space<vmem>>, vector<2x1xf32>,
    return
  }
}

</mosaic_0001>

<llo_original>
// kernel: stgcn_pallas.1
$region0: #{stgcn_pallas.1}
  #allocation0 [shape = 'u32[]', space=smem, size = 0x4, offset = 0x4, fixed_abs, tag = 'smem constant byte address 0x4 - core index']
  #allocation1 [shape = 'u32[72,128]{1,0:T(1,128)}', space=vmem, size = 0x9000, scoped, tag = 'internal scratch']
  %s0 = inlined_call_operand.vmem [shape: f32[48,64], index: 0, kind: input, shape index: {}]
  %s1 = inlined_call_operand.vmem [shape: f32[232,64], index: 1, kind: input, shape index: {}]
  %s2 = inlined_call_operand.vmem [shape: f32[2,1], index: 2, kind: output, shape index: {}]
  %s3 = sld [smem:[#allocation0]]
  $region18: #{stgcn_pallas.1} parent=0
    _
  %s5 = ssub.s32 1, %s3
  %s6 = scalar_select 0, %s5, %s3
  // Predicated region
  $region2: #{stgcn_pallas.1} parent=0 // pred_check
    _
  $region3: #{stgcn_pallas.1} parent=0 // pred_check_branch
    %8 = sbr.rel (0) target = $region5
  $region4: #{stgcn_pallas.1} parent=0 // pred_region
    _
  $region5: #{stgcn_pallas.1} parent=0 // pred_fallthru
    _
  // Predicated region
  $region6: #{stgcn_pallas.1} parent=0 // pred_check
    _
  $region7: #{stgcn_pallas.1} parent=0 // pred_check_branch
    %10 = sbr.rel (0) target = $region9
  $region8: #{stgcn_pallas.1} parent=0 // pred_region
    _
  $region9: #{stgcn_pallas.1} parent=0 // pred_fallthru
    _
  %v11 = vld [vmem:[%s0] sm:$0xff]
  %v12 = vld [vmem:[%s0 + $0x8] sm:$0xff]
  %v13 = vld [vmem:[%s0 + $0x10] sm:$0xff]
  %v14 = vld [vmem:[%s0 + $0x18] sm:$0xff]
  %v15 = vld [vmem:[%s0 + $0x20] sm:$0xff]
  %v16 = vld [vmem:[%s0 + $0x28] sm:$0xff]
  %v17 = vld [vmem:[%s1] sm:$0xff]
  %v18 = vld [vmem:[%s1 + $0x8] sm:$0xff]
  %v19 = vld [vmem:[%s1 + $0x10] sm:$0xff]
  %v20 = vld [vmem:[%s1 + $0x18] sm:$0xff]
  %v21 = vld [vmem:[%s1 + $0x20] sm:$0xff]
  %v22 = vld [vmem:[%s1 + $0x28] sm:$0xff]
  %v23 = vld [vmem:[%s1 + $0x30] sm:$0xff]
  %v24 = vld [vmem:[%s1 + $0x38] sm:$0xff]
  %v25 = vld [vmem:[%s1 + $0x40] sm:$0xff]
  %v26 = vld [vmem:[%s1 + $0x48] sm:$0xff]
  %v27 = vld [vmem:[%s1 + $0x50] sm:$0xff]
  %v28 = vld [vmem:[%s1 + $0x58] sm:$0xff]
  %v29 = vld [vmem:[%s1 + $0x60] sm:$0xff]
  %v30 = vld [vmem:[%s1 + $0x68] sm:$0xff]
  %v31 = vld [vmem:[%s1 + $0x70] sm:$0xff]
  %v32 = vld [vmem:[%s1 + $0x78] sm:$0xff]
  %v33 = vld [vmem:[%s1 + $0x80] sm:$0xff]
  %v34 = vld [vmem:[%s1 + $0x88] sm:$0xff]
  %v35 = vld [vmem:[%s1 + $0x90] sm:$0xff]
  %v36 = vld [vmem:[%s1 + $0x98] sm:$0xff]
  %v37 = vld [vmem:[%s1 + $0xa0] sm:$0xff]
  %v38 = vld [vmem:[%s1 + $0xa8] sm:$0xff]
  %v39 = vld [vmem:[%s1 + $0xb0] sm:$0xff]
  %v40 = vld [vmem:[%s1 + $0xb8] sm:$0xff]
  %v41 = vld [vmem:[%s1 + $0xc0] sm:$0xff]
  %v42 = vld [vmem:[%s1 + $0xc8] sm:$0xff]
  %v43 = vld [vmem:[%s1 + $0xd0] sm:$0xff]
  %v44 = vld [vmem:[%s1 + $0xd8] sm:$0xff]
  %v45 = vld [vmem:[%s1 + $0xe0] sm:$0xff]
  %vm46 = vcmask 523264
  %v48 = vsel %vm46, %v11, 0
  %v51 = vsel %vm46, %v12, 0
  %v54 = vsel %vm46, %v13, 0
  %v57 = vsel %vm46, %v14, 0
  %v60 = vsel %vm46, %v15, 0
  %v63 = vsel %vm46, %v16, 0
  %65 = vmatpush.msra.mxu0 0.0
  %66 = vmatpush.msra.mxu0 0.0
  %67 = vmatpush.msra.mxu0 0.0
  %68 = vmatpush.msra.mxu0 0.0
  %69 = vmatpush.msra.mxu0 0.0
  %70 = vmatpush.msra.mxu0 0.0
  %71 = vmatpush.msra.mxu0 0.0
  %72 = vmatpush.msra.mxu0 0.0
  %v73 = vand.u32 %v24, 4294901760
  %74 = vmatpush.msra.mxu0 %v73
  %v75 = vand.u32 %v23, 4294901760
  %76 = vmatpush.msra.mxu0 %v75
  %v77 = vand.u32 %v22, 4294901760
  %78 = vmatpush.msra.mxu0 %v77
  %v79 = vand.u32 %v21, 4294901760
  %80 = vmatpush.msra.mxu0 %v79
  %v81 = vand.u32 %v20, 4294901760
  %82 = vmatpush.msra.mxu0 %v81
  %v83 = vand.u32 %v19, 4294901760
  %84 = vmatpush.msra.mxu0 %v83
  %v85 = vand.u32 %v18, 4294901760
  %86 = vmatpush.msra.mxu0 %v85
  %v87 = vand.u32 %v17, 4294901760
  %88 = vmatpush.msra.mxu0 %v87
  %v89 = vand.u32 %v48, 4294901760
  %v90 = vsub.f32 %v48, %v89
  %v91 = vand.u32 %v90, 4294901760
  %v92 = vsub.f32 %v90, %v91
  %v93 = vand.u32 %v92, 4294901760
  %94 = vmatmul.f32.gmra.mxu0 %v93
  %v95 = vpop.f32.mrf.mxu0
  %v96 = vadd.f32 0.0, %v95
  %v97 = vand.u32 %v51, 4294901760
  %v98 = vsub.f32 %v51, %v97
  %v99 = vand.u32 %v98, 4294901760
  %v100 = vsub.f32 %v98, %v99
  %v101 = vand.u32 %v100, 4294901760
  %102 = vmatmul.f32.gmra.mxu0 %v101
  %v103 = vpop.f32.mrf.mxu0
  %v104 = vadd.f32 0.0, %v103
  %v105 = vand.u32 %v54, 4294901760
  %v106 = vsub.f32 %v54, %v105
  %v107 = vand.u32 %v106, 4294901760
  %v108 = vsub.f32 %v106, %v107
  %v109 = vand.u32 %v108, 4294901760
  %110 = vmatmul.f32.gmra.mxu0 %v109
  %v111 = vpop.f32.mrf.mxu0
  %v112 = vadd.f32 0.0, %v111
  %v113 = vand.u32 %v57, 4294901760
  %v114 = vsub.f32 %v57, %v113
  %v115 = vand.u32 %v114, 4294901760
  %v116 = vsub.f32 %v114, %v115
  %v117 = vand.u32 %v116, 4294901760
  %118 = vmatmul.f32.gmra.mxu0 %v117
  %v119 = vpop.f32.mrf.mxu0
  %v120 = vadd.f32 0.0, %v119
  %v121 = vand.u32 %v60, 4294901760
  %v122 = vsub.f32 %v60, %v121
  %v123 = vand.u32 %v122, 4294901760
  %v124 = vsub.f32 %v122, %v123
  %v125 = vand.u32 %v124, 4294901760
  %126 = vmatmul.f32.gmra.mxu0 %v125
  %v127 = vpop.f32.mrf.mxu0
  %v128 = vadd.f32 0.0, %v127
  %v129 = vand.u32 %v63, 4294901760
  %v130 = vsub.f32 %v63, %v129
  %v131 = vand.u32 %v130, 4294901760
  %v132 = vsub.f32 %v130, %v131
  %v133 = vand.u32 %v132, 4294901760
  %134 = vmatmul.f32.gmra.mxu0 %v133
  %v135 = vpop.f32.mrf.mxu0
  %v136 = vadd.f32 0.0, %v135
  %137 = vdwg.mxu0
  %138 = vmatpush.msra.mxu0 0.0
  %139 = vmatpush.msra.mxu0 0.0
  %140 = vmatpush.msra.mxu0 0.0
  %141 = vmatpush.msra.mxu0 0.0
  %142 = vmatpush.msra.mxu0 0.0
  %143 = vmatpush.msra.mxu0 0.0
  %144 = vmatpush.msra.mxu0 0.0
  %145 = vmatpush.msra.mxu0 0.0
  %v146 = vand.u32 %v24, 4294901760
  %v147 = vsub.f32 %v24, %v146
  %v148 = vand.u32 %v147, 4294901760
  %v149 = vsub.f32 %v147, %v148
  %v150 = vand.u32 %v149, 4294901760
  %151 = vmatpush.msra.mxu0 %v150
  %v152 = vand.u32 %v23, 4294901760
  %v153 = vsub.f32 %v23, %v152
  %v154 = vand.u32 %v153, 4294901760
  %v155 = vsub.f32 %v153, %v154
  %v156 = vand.u32 %v155, 4294901760
  %157 = vmatpush.msra.mxu0 %v156
  %v158 = vand.u32 %v22, 4294901760
  %v159 = vsub.f32 %v22, %v158
  %v160 = vand.u32 %v159, 4294901760
  %v161 = vsub.f32 %v159, %v160
  %v162 = vand.u32 %v161, 4294901760
  %163 = vmatpush.msra.mxu0 %v162
  %v164 = vand.u32 %v21, 4294901760
  %v165 = vsub.f32 %v21, %v164
  %v166 = vand.u32 %v165, 4294901760
  %v167 = vsub.f32 %v165, %v166
  %v168 = vand.u32 %v167, 4294901760
  %169 = vmatpush.msra.mxu0 %v168
  %v170 = vand.u32 %v20, 4294901760
  %v171 = vsub.f32 %v20, %v170
  %v172 = vand.u32 %v171, 4294901760
  %v173 = vsub.f32 %v171, %v172
  %v174 = vand.u32 %v173, 4294901760
  %175 = vmatpush.msra.mxu0 %v174
  %v176 = vand.u32 %v19, 4294901760
  %v177 = vsub.f32 %v19, %v176
  %v178 = vand.u32 %v177, 4294901760
  %v179 = vsub.f32 %v177, %v178
  %v180 = vand.u32 %v179, 4294901760
  %181 = vmatpush.msra.mxu0 %v180
  %v182 = vand.u32 %v18, 4294901760
  %v183 = vsub.f32 %v18, %v182
  %v184 = vand.u32 %v183, 4294901760
  %v185 = vsub.f32 %v183, %v184
  %v186 = vand.u32 %v185, 4294901760
  %187 = vmatpush.msra.mxu0 %v186
  %v188 = vand.u32 %v17, 4294901760
  %v189 = vsub.f32 %v17, %v188
  %v190 = vand.u32 %v189, 4294901760
  %v191 = vsub.f32 %v189, %v190
  %v192 = vand.u32 %v191, 4294901760
  %193 = vmatpush.msra.mxu0 %v192
  %v194 = vand.u32 %v48, 4294901760
  %195 = vmatmul.f32.gmra.mxu0 %v194
  %v196 = vpop.f32.mrf.mxu0
  %v197 = vadd.f32 %v96, %v196
  %v198 = vand.u32 %v51, 4294901760
  %199 = vmatmul.f32.gmra.mxu0 %v198
  %v200 = vpop.f32.mrf.mxu0
  %v201 = vadd.f32 %v104, %v200
  %v202 = vand.u32 %v54, 4294901760
  %203 = vmatmul.f32.gmra.mxu0 %v202
  %v204 = vpop.f32.mrf.mxu0
  %v205 = vadd.f32 %v112, %v204
  %v206 = vand.u32 %v57, 4294901760
  %207 = vmatmul.f32.gmra.mxu0 %v206
  %v208 = vpop.f32.mrf.mxu0
  %v209 = vadd.f32 %v120, %v208
  %v210 = vand.u32 %v60, 4294901760
  %211 = vmatmul.f32.gmra.mxu0 %v210
  %v212 = vpop.f32.mrf.mxu0
  %v213 = vadd.f32 %v128, %v212
  %v214 = vand.u32 %v63, 4294901760
  %215 = vmatmul.f32.gmra.mxu0 %v214
  %v216 = vpop.f32.mrf.mxu0
  %v217 = vadd.f32 %v136, %v216
  %218 = vdwg.mxu0
  %219 = vmatpush.msra.mxu0 0.0
  %220 = vmatpush.msra.mxu0 0.0
  %221 = vmatpush.msra.mxu0 0.0
  %222 = vmatpush.msra.mxu0 0.0
  %223 = vmatpush.msra.mxu0 0.0
  %224 = vmatpush.msra.mxu0 0.0
  %225 = vmatpush.msra.mxu0 0.0
  %226 = vmatpush.msra.mxu0 0.0
  %v227 = vand.u32 %v24, 4294901760
  %v228 = vsub.f32 %v24, %v227
  %229 = vmatpush.msra.mxu0 %v228
  %v230 = vand.u32 %v23, 4294901760
  %v231 = vsub.f32 %v23, %v230
  %232 = vmatpush.msra.mxu0 %v231
  %v233 = vand.u32 %v22, 4294901760
  %v234 = vsub.f32 %v22, %v233
  %235 = vmatpush.msra.mxu0 %v234
  %v236 = vand.u32 %v21, 4294901760
  %v237 = vsub.f32 %v21, %v236
  %238 = vmatpush.msra.mxu0 %v237
  %v239 = vand.u32 %v20, 4294901760
  %v240 = vsub.f32 %v20, %v239
  %241 = vmatpush.msra.mxu0 %v240
  %v242 = vand.u32 %v19, 4294901760
  %v243 = vsub.f32 %v19, %v242
  %244 = vmatpush.msra.mxu0 %v243
  %v245 = vand.u32 %v18, 4294901760
  %v246 = vsub.f32 %v18, %v245
  %247 = vmatpush.msra.mxu0 %v246
  %v248 = vand.u32 %v17, 4294901760
  %v249 = vsub.f32 %v17, %v248
  %250 = vmatpush.msra.mxu0 %v249
  %v251 = vand.u32 %v48, 4294901760
  %v252 = vsub.f32 %v48, %v251
  %253 = vmatmul.f32.gmra.mxu0 %v252
  %v254 = vpop.f32.mrf.mxu0
  %v255 = vadd.f32 %v197, %v254
  %v256 = vand.u32 %v51, 4294901760
  %v257 = vsub.f32 %v51, %v256
  %258 = vmatmul.f32.gmra.mxu0 %v257
  %v259 = vpop.f32.mrf.mxu0
  %v260 = vadd.f32 %v201, %v259
  %v261 = vand.u32 %v54, 4294901760
  %v262 = vsub.f32 %v54, %v261
  %263 = vmatmul.f32.gmra.mxu0 %v262
  %v264 = vpop.f32.mrf.mxu0
  %v265 = vadd.f32 %v205, %v264
  %v266 = vand.u32 %v57, 4294901760
  %v267 = vsub.f32 %v57, %v266
  %268 = vmatmul.f32.gmra.mxu0 %v267
  %v269 = vpop.f32.mrf.mxu0
  %v270 = vadd.f32 %v209, %v269
  %v271 = vand.u32 %v60, 4294901760
  %v272 = vsub.f32 %v60, %v271
  %273 = vmatmul.f32.gmra.mxu0 %v272
  %v274 = vpop.f32.mrf.mxu0
  %v275 = vadd.f32 %v213, %v274
  %v276 = vand.u32 %v63, 4294901760
  %v277 = vsub.f32 %v63, %v276
  %278 = vmatmul.f32.gmra.mxu0 %v277
  %v279 = vpop.f32.mrf.mxu0
  %v280 = vadd.f32 %v217, %v279
  %281 = vdwg.mxu0
  %282 = vmatpush.msra.mxu0 0.0
  %283 = vmatpush.msra.mxu0 0.0
  %284 = vmatpush.msra.mxu0 0.0
  %285 = vmatpush.msra.mxu0 0.0
  %286 = vmatpush.msra.mxu0 0.0
  %287 = vmatpush.msra.mxu0 0.0
  %288 = vmatpush.msra.mxu0 0.0
  %289 = vmatpush.msra.mxu0 0.0
  %v290 = vand.u32 %v24, 4294901760
  %291 = vmatpush.msra.mxu0 %v290
  %v292 = vand.u32 %v23, 4294901760
  %293 = vmatpush.msra.mxu0 %v292
  %v294 = vand.u32 %v22, 4294901760
  %295 = vmatpush.msra.mxu0 %v294
  %v296 = vand.u32 %v21, 4294901760
  %297 = vmatpush.msra.mxu0 %v296
  %v298 = vand.u32 %v20, 4294901760
  %299 = vmatpush.msra.mxu0 %v298
  %v300 = vand.u32 %v19, 4294901760
  %301 = vmatpush.msra.mxu0 %v300
  %v302 = vand.u32 %v18, 4294901760
  %303 = vmatpush.msra.mxu0 %v302
  %v304 = vand.u32 %v17, 4294901760
  %305 = vmatpush.msra.mxu0 %v304
  %v306 = vand.u32 %v48, 4294901760
  %v307 = vsub.f32 %v48, %v306
  %v308 = vand.u32 %v307, 4294901760
  %309 = vmatmul.f32.gmra.mxu0 %v308
  %v310 = vpop.f32.mrf.mxu0
  %v311 = vadd.f32 %v255, %v310
  %v312 = vand.u32 %v51, 4294901760
  %v313 = vsub.f32 %v51, %v312
  %v314 = vand.u32 %v313, 4294901760
  %315 = vmatmul.f32.gmra.mxu0 %v314
  %v316 = vpop.f32.mrf.mxu0
  %v317 = vadd.f32 %v260, %v316
  %v318 = vand.u32 %v54, 4294901760
  %v319 = vsub.f32 %v54, %v318
  %v320 = vand.u32 %v319, 4294901760
  %321 = vmatmul.f32.gmra.mxu0 %v320
  %v322 = vpop.f32.mrf.mxu0
  %v323 = vadd.f32 %v265, %v322
  %v324 = vand.u32 %v57, 4294901760
  %v325 = vsub.f32 %v57, %v324
  %v326 = vand.u32 %v325, 4294901760
  %327 = vmatmul.f32.gmra.mxu0 %v326
  %v328 = vpop.f32.mrf.mxu0
  %v329 = vadd.f32 %v270, %v328
  %v330 = vand.u32 %v60, 4294901760
  %v331 = vsub.f32 %v60, %v330
  %v332 = vand.u32 %v331, 4294901760
  %333 = vmatmul.f32.gmra.mxu0 %v332
  %v334 = vpop.f32.mrf.mxu0
  %v335 = vadd.f32 %v275, %v334
  %v336 = vand.u32 %v63, 4294901760
  %v337 = vsub.f32 %v63, %v336
  %v338 = vand.u32 %v337, 4294901760
  %339 = vmatmul.f32.gmra.mxu0 %v338
  %v340 = vpop.f32.mrf.mxu0
  %v341 = vadd.f32 %v280, %v340
  %342 = vdwg.mxu0
  %343 = vmatpush.msra.mxu0 0.0
  %344 = vmatpush.msra.mxu0 0.0
  %345 = vmatpush.msra.mxu0 0.0
  %346 = vmatpush.msra.mxu0 0.0
  %347 = vmatpush.msra.mxu0 0.0
  %348 = vmatpush.msra.mxu0 0.0
  %349 = vmatpush.msra.mxu0 0.0
  %350 = vmatpush.msra.mxu0 0.0
  %v351 = vand.u32 %v24, 4294901760
  %v352 = vsub.f32 %v24, %v351
  %v353 = vand.u32 %v352, 4294901760
  %354 = vmatpush.msra.mxu0 %v353
  %v355 = vand.u32 %v23, 4294901760
  %v356 = vsub.f32 %v23, %v355
  %v357 = vand.u32 %v356, 4294901760
  %358 = vmatpush.msra.mxu0 %v357
  %v359 = vand.u32 %v22, 4294901760
  %v360 = vsub.f32 %v22, %v359
  %v361 = vand.u32 %v360, 4294901760
  %362 = vmatpush.msra.mxu0 %v361
  %v363 = vand.u32 %v21, 4294901760
  %v364 = vsub.f32 %v21, %v363
  %v365 = vand.u32 %v364, 4294901760
  %366 = vmatpush.msra.mxu0 %v365
  %v367 = vand.u32 %v20, 4294901760
  %v368 = vsub.f32 %v20, %v367
  %v369 = vand.u32 %v368, 4294901760
  %370 = vmatpush.msra.mxu0 %v369
  %v371 = vand.u32 %v19, 4294901760
  %v372 = vsub.f32 %v19, %v371
  %v373 = vand.u32 %v372, 4294901760
  %374 = vmatpush.msra.mxu0 %v373
  %v375 = vand.u32 %v18, 4294901760
  %v376 = vsub.f32 %v18, %v375
  %v377 = vand.u32 %v376, 4294901760
  %378 = vmatpush.msra.mxu0 %v377
  %v379 = vand.u32 %v17, 4294901760
  %v380 = vsub.f32 %v17, %v379
  %v381 = vand.u32 %v380, 4294901760
  %382 = vmatpush.msra.mxu0 %v381
  %v383 = vand.u32 %v48, 4294901760
  %384 = vmatmul.f32.gmra.mxu0 %v383
  %v385 = vpop.f32.mrf.mxu0
  %v386 = vadd.f32 %v311, %v385
  %v387 = vand.u32 %v51, 4294901760
  %388 = vmatmul.f32.gmra.mxu0 %v387
  %v389 = vpop.f32.mrf.mxu0
  %v390 = vadd.f32 %v317, %v389
  %v391 = vand.u32 %v54, 4294901760
  %392 = vmatmul.f32.gmra.mxu0 %v391
  %v393 = vpop.f32.mrf.mxu0
  %v394 = vadd.f32 %v323, %v393
  %v395 = vand.u32 %v57, 4294901760
  %396 = vmatmul.f32.gmra.mxu0 %v395
  %v397 = vpop.f32.mrf.mxu0
  %v398 = vadd.f32 %v329, %v397
  %v399 = vand.u32 %v60, 4294901760
  %400 = vmatmul.f32.gmra.mxu0 %v399
  %v401 = vpop.f32.mrf.mxu0
  %v402 = vadd.f32 %v335, %v401
  %v403 = vand.u32 %v63, 4294901760
  %404 = vmatmul.f32.gmra.mxu0 %v403
  %v405 = vpop.f32.mrf.mxu0
  %v406 = vadd.f32 %v341, %v405
  %407 = vdwg.mxu0
  %408 = vmatpush.msra.mxu0 0.0
  %409 = vmatpush.msra.mxu0 0.0
  %410 = vmatpush.msra.mxu0 0.0
  %411 = vmatpush.msra.mxu0 0.0
  %412 = vmatpush.msra.mxu0 0.0
  %413 = vmatpush.msra.mxu0 0.0
  %414 = vmatpush.msra.mxu0 0.0
  %415 = vmatpush.msra.mxu0 0.0
  %v416 = vand.u32 %v24, 4294901760
  %417 = vmatpush.msra.mxu0 %v416
  %v418 = vand.u32 %v23, 4294901760
  %419 = vmatpush.msra.mxu0 %v418
  %v420 = vand.u32 %v22, 4294901760
  %421 = vmatpush.msra.mxu0 %v420
  %v422 = vand.u32 %v21, 4294901760
  %423 = vmatpush.msra.mxu0 %v422
  %v424 = vand.u32 %v20, 4294901760
  %425 = vmatpush.msra.mxu0 %v424
  %v426 = vand.u32 %v19, 4294901760
  %427 = vmatpush.msra.mxu0 %v426
  %v428 = vand.u32 %v18, 4294901760
  %429 = vmatpush.msra.mxu0 %v428
  %v430 = vand.u32 %v17, 4294901760
  %431 = vmatpush.msra.mxu0 %v430
  %v432 = vand.u32 %v48, 4294901760
  %433 = vmatmul.f32.gmra.mxu0 %v432
  %v434 = vpop.f32.mrf.mxu0
  %v435 = vadd.f32 %v386, %v434
  %v436 = vand.u32 %v51, 4294901760
  %437 = vmatmul.f32.gmra.mxu0 %v436
  %v438 = vpop.f32.mrf.mxu0
  %v439 = vadd.f32 %v390, %v438
  %v440 = vand.u32 %v54, 4294901760
  %441 = vmatmul.f32.gmra.mxu0 %v440
  %v442 = vpop.f32.mrf.mxu0
  %v443 = vadd.f32 %v394, %v442
  %v444 = vand.u32 %v57, 4294901760
  %445 = vmatmul.f32.gmra.mxu0 %v444
  %v446 = vpop.f32.mrf.mxu0
  %v447 = vadd.f32 %v398, %v446
  %v448 = vand.u32 %v60, 4294901760
  %449 = vmatmul.f32.gmra.mxu0 %v448
  %v450 = vpop.f32.mrf.mxu0
  %v451 = vadd.f32 %v402, %v450
  %v452 = vand.u32 %v63, 4294901760
  %453 = vmatmul.f32.gmra.mxu0 %v452
  %v454 = vpop.f32.mrf.mxu0
  %v455 = vadd.f32 %v406, %v454
  %456 = vdwg.mxu0
  %v457 = vadd.f32 %v11, %v13
  %v458 = vadd.f32 %v12, %v14
  %v459 = vadd.f32 %v457, %v15
  %v460 = vadd.f32 %v458, %v16
  %vm461 = vcmp.gt.f32.partialorder %v459, 0.0
  %vm462 = vcmp.gt.f32.partialorder %v460, 0.0
  %v463 = vrsqrt.pop %v459
  %v464 = vmul.f32 %v463, %v459
  %v465 = vmul.f32 %v464, %v463
  %v466 = vmul.f32 0.5, %v465
  %v467 = vsub.f32 1.5, %v466
  %v468 = vmul.f32 %v463, %v467
  %vm469 = vweird.f32 %v459
  %vm470 = vweird.f32 %v463
  %vm471 = vmor %vm469, %vm470
  %v472 = vsel %vm471, %v463, %v468
  %v473 = vrsqrt.pop %v460
  %v474 = vmul.f32 %v473, %v460
  %v475 = vmul.f32 %v474, %v473
  %v476 = vmul.f32 0.5, %v475
  %v477 = vsub.f32 1.5, %v476
  %v478 = vmul.f32 %v473, %v477
  %vm479 = vweird.f32 %v460
  %vm480 = vweird.f32 %v473
  %vm481 = vmor %vm479, %vm480
  %v482 = vsel %vm481, %v473, %v478
  %v483 = vsel %vm461, %v472, 0.0
  %v484 = vsel %vm462, %v482, 0.0
  %486 = vset.pattern.permute.xlu0 4
  %487 = vperm.xlu0 %486, %v483
  %v488 = vpop.permute.xlu0 %487
  %491 = vset.pattern.permute.xlu0 4
  %492 = vperm.xlu0 %491, %v484
  %v493 = vpop.permute.xlu0 %492
  %v495 = vmul.f32 %v488, %v11
  %v496 = vmul.f32 %v493, %v12
  %v497 = vmul.f32 %v495, %v483
  %v498 = vmul.f32 %v496, %v484
  %499 = vset.pattern.permute.xlu0 5
  %500 = vperm.xlu0 %499, %v483
  %v501 = vpop.permute.xlu0 %500
  %503 = vset.pattern.permute.xlu0 5
  %504 = vperm.xlu0 %503, %v484
  %v505 = vpop.permute.xlu0 %504
  %v507 = vmul.f32 %v501, %v13
  %v508 = vmul.f32 %v505, %v14
  %v509 = vmul.f32 %v507, %v483
  %v510 = vmul.f32 %v508, %v484
  %511 = vset.pattern.permute.xlu0 6
  %512 = vperm.xlu0 %511, %v483
  %v513 = vpop.permute.xlu0 %512
  %515 = vset.pattern.permute.xlu0 6
  %516 = vperm.xlu0 %515, %v484
  %v517 = vpop.permute.xlu0 %516
  %v519 = vmul.f32 %v513, %v15
  %v520 = vmul.f32 %v517, %v16
  %v521 = vmul.f32 %v519, %v483
  %v522 = vmul.f32 %v520, %v484
  %524 = vset.pattern.permute.xlu0 4
  %525 = vperm.xlu0 %524, %v497
  %v526 = vpop.permute.xlu0 %525
  %529 = vset.pattern.permute.xlu0 4
  %530 = vperm.xlu0 %529, %v498
  %v531 = vpop.permute.xlu0 %530
  %v533 = vmul.f32 %v526, %v435
  %v534 = vmul.f32 %v531, %v439
  %536 = vset.pattern.permute.xlu0 4
  %537 = vperm.xlu0 %536, %v509
  %v538 = vpop.permute.xlu0 %537
  %541 = vset.pattern.permute.xlu0 4
  %542 = vperm.xlu0 %541, %v510
  %v543 = vpop.permute.xlu0 %542
  %v545 = vmul.f32 %v538, %v443
  %v546 = vmul.f32 %v543, %v447
  %548 = vset.pattern.permute.xlu0 4
  %549 = vperm.xlu0 %548, %v521
  %v550 = vpop.permute.xlu0 %549
  %553 = vset.pattern.permute.xlu0 4
  %554 = vperm.xlu0 %553, %v522
  %v555 = vpop.permute.xlu0 %554
  %v557 = vmul.f32 %v550, %v451
  %v558 = vmul.f32 %v555, %v455
  %v559 = vadd.f32 %v533, %v545
  %v560 = vadd.f32 %v534, %v546
  %v561 = vadd.f32 %v559, %v557
  %v562 = vadd.f32 %v560, %v558
  %563 = vset.pattern.permute.xlu0 5
  %564 = vperm.xlu0 %563, %v497
  %v565 = vpop.permute.xlu0 %564
  %567 = vset.pattern.permute.xlu0 5
  %568 = vperm.xlu0 %567, %v498
  %v569 = vpop.permute.xlu0 %568
  %v571 = vmul.f32 %v565, %v435
  %v572 = vmul.f32 %v569, %v439
  %573 = vset.pattern.permute.xlu0 5
  %574 = vperm.xlu0 %573, %v509
  %v575 = vpop.permute.xlu0 %574
  %577 = vset.pattern.permute.xlu0 5
  %578 = vperm.xlu0 %577, %v510
  %v579 = vpop.permute.xlu0 %578
  %v581 = vmul.f32 %v575, %v443
  %v582 = vmul.f32 %v579, %v447
  %583 = vset.pattern.permute.xlu0 5
  %584 = vperm.xlu0 %583, %v521
  %v585 = vpop.permute.xlu0 %584
  %587 = vset.pattern.permute.xlu0 5
  %588 = vperm.xlu0 %587, %v522
  %v589 = vpop.permute.xlu0 %588
  %v591 = vmul.f32 %v585, %v451
  %v592 = vmul.f32 %v589, %v455
  %v593 = vadd.f32 %v571, %v581
  %v594 = vadd.f32 %v572, %v582
  %v595 = vadd.f32 %v593, %v591
  %v596 = vadd.f32 %v594, %v592
  %597 = vset.pattern.permute.xlu0 6
  %598 = vperm.xlu0 %597, %v497
  %v599 = vpop.permute.xlu0 %598
  %601 = vset.pattern.permute.xlu0 6
  %602 = vperm.xlu0 %601, %v498
  %v603 = vpop.permute.xlu0 %602
  %v605 = vmul.f32 %v599, %v435
  %v606 = vmul.f32 %v603, %v439
  %607 = vset.pattern.permute.xlu0 6
  %608 = vperm.xlu0 %607, %v509
  %v609 = vpop.permute.xlu0 %608
  %611 = vset.pattern.permute.xlu0 6
  %612 = vperm.xlu0 %611, %v510
  %v613 = vpop.permute.xlu0 %612
  %v615 = vmul.f32 %v609, %v443
  %v616 = vmul.f32 %v613, %v447
  %617 = vset.pattern.permute.xlu0 6
  %618 = vperm.xlu0 %617, %v521
  %v619 = vpop.permute.xlu0 %618
  %621 = vset.pattern.permute.xlu0 6
  %622 = vperm.xlu0 %621, %v522
  %v623 = vpop.permute.xlu0 %622
  %v625 = vmul.f32 %v619, %v451
  %v626 = vmul.f32 %v623, %v455
  %v627 = vadd.f32 %v605, %v615
  %v628 = vadd.f32 %v606, %v616
  %v629 = vadd.f32 %v627, %v625
  %v630 = vadd.f32 %v628, %v626
  %v631 = vadd.f32 %v561, %v33
  %v632 = vadd.f32 %v562, %v34
  %v633 = vadd.f32 %v595, %v35
  %v634 = vadd.f32 %v596, %v36
  %v635 = vadd.f32 %v629, %v37
  %v636 = vadd.f32 %v630, %v38
  %v638 = vsel %vm46, %v631, 0
  %v641 = vsel %vm46, %v632, 0
  %v644 = vsel %vm46, %v633, 0
  %v647 = vsel %vm46, %v634, 0
  %v650 = vsel %vm46, %v635, 0
  %v653 = vsel %vm46, %v636, 0
  %655 = vmatpush.msra.mxu0 0.0
  %656 = vmatpush.msra.mxu0 0.0
  %657 = vmatpush.msra.mxu0 0.0
  %658 = vmatpush.msra.mxu0 0.0
  %659 = vmatpush.msra.mxu0 0.0
  %660 = vmatpush.msra.mxu0 0.0
  %661 = vmatpush.msra.mxu0 0.0
  %662 = vmatpush.msra.mxu0 0.0
  %v663 = vand.u32 %v32, 4294901760
  %664 = vmatpush.msra.mxu0 %v663
  %v665 = vand.u32 %v31, 4294901760
  %666 = vmatpush.msra.mxu0 %v665
  %v667 = vand.u32 %v30, 4294901760
  %668 = vmatpush.msra.mxu0 %v667
  %v669 = vand.u32 %v29, 4294901760
  %670 = vmatpush.msra.mxu0 %v669
  %v671 = vand.u32 %v28, 4294901760
  %672 = vmatpush.msra.mxu0 %v671
  %v673 = vand.u32 %v27, 4294901760
  %674 = vmatpush.msra.mxu0 %v673
  %v675 = vand.u32 %v26, 4294901760
  %676 = vmatpush.msra.mxu0 %v675
  %v677 = vand.u32 %v25, 4294901760
  %678 = vmatpush.msra.mxu0 %v677
  %v679 = vand.u32 %v638, 4294901760
  %v680 = vsub.f32 %v638, %v679
  %v681 = vand.u32 %v680, 4294901760
  %v682 = vsub.f32 %v680, %v681
  %v683 = vand.u32 %v682, 4294901760
  %684 = vmatmul.f32.gmra.mxu0 %v683
  %v685 = vpop.f32.mrf.mxu0
  %v686 = vadd.f32 %v39, %v685
  %v687 = vand.u32 %v641, 4294901760
  %v688 = vsub.f32 %v641, %v687
  %v689 = vand.u32 %v688, 4294901760
  %v690 = vsub.f32 %v688, %v689
  %v691 = vand.u32 %v690, 4294901760
  %692 = vmatmul.f32.gmra.mxu0 %v691
  %v693 = vpop.f32.mrf.mxu0
  %v694 = vadd.f32 %v40, %v693
  %v695 = vand.u32 %v644, 4294901760
  %v696 = vsub.f32 %v644, %v695
  %v697 = vand.u32 %v696, 4294901760
  %v698 = vsub.f32 %v696, %v697
  %v699 = vand.u32 %v698, 4294901760
  %700 = vmatmul.f32.gmra.mxu0 %v699
  %v701 = vpop.f32.mrf.mxu0
  %v702 = vadd.f32 %v41, %v701
  %v703 = vand.u32 %v647, 4294901760
  %v704 = vsub.f32 %v647, %v703
  %v705 = vand.u32 %v704, 4294901760
  %v706 = vsub.f32 %v704, %v705
  %v707 = vand.u32 %v706, 4294901760
  %708 = vmatmul.f32.gmra.mxu0 %v707
  %v709 = vpop.f32.mrf.mxu0
  %v710 = vadd.f32 %v42, %v709
  %v711 = vand.u32 %v650, 4294901760
  %v712 = vsub.f32 %v650, %v711
  %v713 = vand.u32 %v712, 4294901760
  %v714 = vsub.f32 %v712, %v713
  %v715 = vand.u32 %v714, 4294901760
  %716 = vmatmul.f32.gmra.mxu0 %v715
  %v717 = vpop.f32.mrf.mxu0
  %v718 = vadd.f32 %v43, %v717
  %v719 = vand.u32 %v653, 4294901760
  %v720 = vsub.f32 %v653, %v719
  %v721 = vand.u32 %v720, 4294901760
  %v722 = vsub.f32 %v720, %v721
  %v723 = vand.u32 %v722, 4294901760
  %724 = vmatmul.f32.gmra.mxu0 %v723
  %v725 = vpop.f32.mrf.mxu0
  %v726 = vadd.f32 %v44, %v725
  %727 = vdwg.mxu0
  %728 = vmatpush.msra.mxu0 0.0
  %729 = vmatpush.msra.mxu0 0.0
  %730 = vmatpush.msra.mxu0 0.0
  %731 = vmatpush.msra.mxu0 0.0
  %732 = vmatpush.msra.mxu0 0.0
  %733 = vmatpush.msra.mxu0 0.0
  %734 = vmatpush.msra.mxu0 0.0
  %735 = vmatpush.msra.mxu0 0.0
  %v736 = vand.u32 %v32, 4294901760
  %v737 = vsub.f32 %v32, %v736
  %v738 = vand.u32 %v737, 4294901760
  %v739 = vsub.f32 %v737, %v738
  %v740 = vand.u32 %v739, 4294901760
  %741 = vmatpush.msra.mxu0 %v740
  %v742 = vand.u32 %v31, 4294901760
  %v743 = vsub.f32 %v31, %v742
  %v744 = vand.u32 %v743, 4294901760
  %v745 = vsub.f32 %v743, %v744
  %v746 = vand.u32 %v745, 4294901760
  %747 = vmatpush.msra.mxu0 %v746
  %v748 = vand.u32 %v30, 4294901760
  %v749 = vsub.f32 %v30, %v748
  %v750 = vand.u32 %v749, 4294901760
  %v751 = vsub.f32 %v749, %v750
  %v752 = vand.u32 %v751, 4294901760
  %753 = vmatpush.msra.mxu0 %v752
  %v754 = vand.u32 %v29, 4294901760
  %v755 = vsub.f32 %v29, %v754
  %v756 = vand.u32 %v755, 4294901760
  %v757 = vsub.f32 %v755, %v756
  %v758 = vand.u32 %v757, 4294901760
  %759 = vmatpush.msra.mxu0 %v758
  %v760 = vand.u32 %v28, 4294901760
  %v761 = vsub.f32 %v28, %v760
  %v762 = vand.u32 %v761, 4294901760
  %v763 = vsub.f32 %v761, %v762
  %v764 = vand.u32 %v763, 4294901760
  %765 = vmatpush.msra.mxu0 %v764
  %v766 = vand.u32 %v27, 4294901760
  %v767 = vsub.f32 %v27, %v766
  %v768 = vand.u32 %v767, 4294901760
  %v769 = vsub.f32 %v767, %v768
  %v770 = vand.u32 %v769, 4294901760
  %771 = vmatpush.msra.mxu0 %v770
  %v772 = vand.u32 %v26, 4294901760
  %v773 = vsub.f32 %v26, %v772
  %v774 = vand.u32 %v773, 4294901760
  %v775 = vsub.f32 %v773, %v774
  %v776 = vand.u32 %v775, 4294901760
  %777 = vmatpush.msra.mxu0 %v776
  %v778 = vand.u32 %v25, 4294901760
  %v779 = vsub.f32 %v25, %v778
  %v780 = vand.u32 %v779, 4294901760
  %v781 = vsub.f32 %v779, %v780
  %v782 = vand.u32 %v781, 4294901760
  %783 = vmatpush.msra.mxu0 %v782
  %v784 = vand.u32 %v638, 4294901760
  %785 = vmatmul.f32.gmra.mxu0 %v784
  %v786 = vpop.f32.mrf.mxu0
  %v787 = vadd.f32 %v686, %v786
  %v788 = vand.u32 %v641, 4294901760
  %789 = vmatmul.f32.gmra.mxu0 %v788
  %v790 = vpop.f32.mrf.mxu0
  %v791 = vadd.f32 %v694, %v790
  %v792 = vand.u32 %v644, 4294901760
  %793 = vmatmul.f32.gmra.mxu0 %v792
  %v794 = vpop.f32.mrf.mxu0
  %v795 = vadd.f32 %v702, %v794
  %v796 = vand.u32 %v647, 4294901760
  %797 = vmatmul.f32.gmra.mxu0 %v796
  %v798 = vpop.f32.mrf.mxu0
  %v799 = vadd.f32 %v710, %v798
  %v800 = vand.u32 %v650, 4294901760
  %801 = vmatmul.f32.gmra.mxu0 %v800
  %v802 = vpop.f32.mrf.mxu0
  %v803 = vadd.f32 %v718, %v802
  %v804 = vand.u32 %v653, 4294901760
  %805 = vmatmul.f32.gmra.mxu0 %v804
  %v806 = vpop.f32.mrf.mxu0
  %v807 = vadd.f32 %v726, %v806
  %808 = vdwg.mxu0
  %809 = vmatpush.msra.mxu0 0.0
  %810 = vmatpush.msra.mxu0 0.0
  %811 = vmatpush.msra.mxu0 0.0
  %812 = vmatpush.msra.mxu0 0.0
  %813 = vmatpush.msra.mxu0 0.0
  %814 = vmatpush.msra.mxu0 0.0
  %815 = vmatpush.msra.mxu0 0.0
  %816 = vmatpush.msra.mxu0 0.0
  %v817 = vand.u32 %v32, 4294901760
  %v818 = vsub.f32 %v32, %v817
  %819 = vmatpush.msra.mxu0 %v818
  %v820 = vand.u32 %v31, 4294901760
  %v821 = vsub.f32 %v31, %v820
  %822 = vmatpush.msra.mxu0 %v821
  %v823 = vand.u32 %v30, 4294901760
  %v824 = vsub.f32 %v30, %v823
  %825 = vmatpush.msra.mxu0 %v824
  %v826 = vand.u32 %v29, 4294901760
  %v827 = vsub.f32 %v29, %v826
  %828 = vmatpush.msra.mxu0 %v827
  %v829 = vand.u32 %v28, 4294901760
  %v830 = vsub.f32 %v28, %v829
  %831 = vmatpush.msra.mxu0 %v830
  %v832 = vand.u32 %v27, 4294901760
  %v833 = vsub.f32 %v27, %v832
  %834 = vmatpush.msra.mxu0 %v833
  %v835 = vand.u32 %v26, 4294901760
  %v836 = vsub.f32 %v26, %v835
  %837 = vmatpush.msra.mxu0 %v836
  %v838 = vand.u32 %v25, 4294901760
  %v839 = vsub.f32 %v25, %v838
  %840 = vmatpush.msra.mxu0 %v839
  %v841 = vand.u32 %v638, 4294901760
  %v842 = vsub.f32 %v638, %v841
  %843 = vmatmul.f32.gmra.mxu0 %v842
  %v844 = vpop.f32.mrf.mxu0
  %v845 = vadd.f32 %v787, %v844
  %v846 = vand.u32 %v641, 4294901760
  %v847 = vsub.f32 %v641, %v846
  %848 = vmatmul.f32.gmra.mxu0 %v847
  %v849 = vpop.f32.mrf.mxu0
  %v850 = vadd.f32 %v791, %v849
  %v851 = vand.u32 %v644, 4294901760
  %v852 = vsub.f32 %v644, %v851
  %853 = vmatmul.f32.gmra.mxu0 %v852
  %v854 = vpop.f32.mrf.mxu0
  %v855 = vadd.f32 %v795, %v854
  %v856 = vand.u32 %v647, 4294901760
  %v857 = vsub.f32 %v647, %v856
  %858 = vmatmul.f32.gmra.mxu0 %v857
  %v859 = vpop.f32.mrf.mxu0
  %v860 = vadd.f32 %v799, %v859
  %v861 = vand.u32 %v650, 4294901760
  %v862 = vsub.f32 %v650, %v861
  %863 = vmatmul.f32.gmra.mxu0 %v862
  %v864 = vpop.f32.mrf.mxu0
  %v865 = vadd.f32 %v803, %v864
  %v866 = vand.u32 %v653, 4294901760
  %v867 = vsub.f32 %v653, %v866
  %868 = vmatmul.f32.gmra.mxu0 %v867
  %v869 = vpop.f32.mrf.mxu0
  %v870 = vadd.f32 %v807, %v869
  %871 = vdwg.mxu0
  %872 = vmatpush.msra.mxu0 0.0
  %873 = vmatpush.msra.mxu0 0.0
  %874 = vmatpush.msra.mxu0 0.0
  %875 = vmatpush.msra.mxu0 0.0
  %876 = vmatpush.msra.mxu0 0.0
  %877 = vmatpush.msra.mxu0 0.0
  %878 = vmatpush.msra.mxu0 0.0
  %879 = vmatpush.msra.mxu0 0.0
  %v880 = vand.u32 %v32, 4294901760
  %881 = vmatpush.msra.mxu0 %v880
  %v882 = vand.u32 %v31, 4294901760
  %883 = vmatpush.msra.mxu0 %v882
  %v884 = vand.u32 %v30, 4294901760
  %885 = vmatpush.msra.mxu0 %v884
  %v886 = vand.u32 %v29, 4294901760
  %887 = vmatpush.msra.mxu0 %v886
  %v888 = vand.u32 %v28, 4294901760
  %889 = vmatpush.msra.mxu0 %v888
  %v890 = vand.u32 %v27, 4294901760
  %891 = vmatpush.msra.mxu0 %v890
  %v892 = vand.u32 %v26, 4294901760
  %893 = vmatpush.msra.mxu0 %v892
  %v894 = vand.u32 %v25, 4294901760
  %895 = vmatpush.msra.mxu0 %v894
  %v896 = vand.u32 %v638, 4294901760
  %v897 = vsub.f32 %v638, %v896
  %v898 = vand.u32 %v897, 4294901760
  %899 = vmatmul.f32.gmra.mxu0 %v898
  %v900 = vpop.f32.mrf.mxu0
  %v901 = vadd.f32 %v845, %v900
  %v902 = vand.u32 %v641, 4294901760
  %v903 = vsub.f32 %v641, %v902
  %v904 = vand.u32 %v903, 4294901760
  %905 = vmatmul.f32.gmra.mxu0 %v904
  %v906 = vpop.f32.mrf.mxu0
  %v907 = vadd.f32 %v850, %v906
  %v908 = vand.u32 %v644, 4294901760
  %v909 = vsub.f32 %v644, %v908
  %v910 = vand.u32 %v909, 4294901760
  %911 = vmatmul.f32.gmra.mxu0 %v910
  %v912 = vpop.f32.mrf.mxu0
  %v913 = vadd.f32 %v855, %v912
  %v914 = vand.u32 %v647, 4294901760
  %v915 = vsub.f32 %v647, %v914
  %v916 = vand.u32 %v915, 4294901760
  %917 = vmatmul.f32.gmra.mxu0 %v916
  %v918 = vpop.f32.mrf.mxu0
  %v919 = vadd.f32 %v860, %v918
  %v920 = vand.u32 %v650, 4294901760
  %v921 = vsub.f32 %v650, %v920
  %v922 = vand.u32 %v921, 4294901760
  %923 = vmatmul.f32.gmra.mxu0 %v922
  %v924 = vpop.f32.mrf.mxu0
  %v925 = vadd.f32 %v865, %v924
  %v926 = vand.u32 %v653, 4294901760
  %v927 = vsub.f32 %v653, %v926
  %v928 = vand.u32 %v927, 4294901760
  %929 = vmatmul.f32.gmra.mxu0 %v928
  %v930 = vpop.f32.mrf.mxu0
  %v931 = vadd.f32 %v870, %v930
  %932 = vdwg.mxu0
  %933 = vmatpush.msra.mxu0 0.0
  %934 = vmatpush.msra.mxu0 0.0
  %935 = vmatpush.msra.mxu0 0.0
  %936 = vmatpush.msra.mxu0 0.0
  %937 = vmatpush.msra.mxu0 0.0
  %938 = vmatpush.msra.mxu0 0.0
  %939 = vmatpush.msra.mxu0 0.0
  %940 = vmatpush.msra.mxu0 0.0
  %v941 = vand.u32 %v32, 4294901760
  %v942 = vsub.f32 %v32, %v941
  %v943 = vand.u32 %v942, 4294901760
  %944 = vmatpush.msra.mxu0 %v943
  %v945 = vand.u32 %v31, 4294901760
  %v946 = vsub.f32 %v31, %v945
  %v947 = vand.u32 %v946, 4294901760
  %948 = vmatpush.msra.mxu0 %v947
  %v949 = vand.u32 %v30, 4294901760
  %v950 = vsub.f32 %v30, %v949
  %v951 = vand.u32 %v950, 4294901760
  %952 = vmatpush.msra.mxu0 %v951
  %v953 = vand.u32 %v29, 4294901760
  %v954 = vsub.f32 %v29, %v953
  %v955 = vand.u32 %v954, 4294901760
  %956 = vmatpush.msra.mxu0 %v955
  %v957 = vand.u32 %v28, 4294901760
  %v958 = vsub.f32 %v28, %v957
  %v959 = vand.u32 %v958, 4294901760
  %960 = vmatpush.msra.mxu0 %v959
  %v961 = vand.u32 %v27, 4294901760
  %v962 = vsub.f32 %v27, %v961
  %v963 = vand.u32 %v962, 4294901760
  %964 = vmatpush.msra.mxu0 %v963
  %v965 = vand.u32 %v26, 4294901760
  %v966 = vsub.f32 %v26, %v965
  %v967 = vand.u32 %v966, 4294901760
  %968 = vmatpush.msra.mxu0 %v967
  %v969 = vand.u32 %v25, 4294901760
  %v970 = vsub.f32 %v25, %v969
  %v971 = vand.u32 %v970, 4294901760
  %972 = vmatpush.msra.mxu0 %v971
  %v973 = vand.u32 %v638, 4294901760
  %974 = vmatmul.f32.gmra.mxu0 %v973
  %v975 = vpop.f32.mrf.mxu0
  %v976 = vadd.f32 %v901, %v975
  %v977 = vand.u32 %v641, 4294901760
  %978 = vmatmul.f32.gmra.mxu0 %v977
  %v979 = vpop.f32.mrf.mxu0
  %v980 = vadd.f32 %v907, %v979
  %v981 = vand.u32 %v644, 4294901760
  %982 = vmatmul.f32.gmra.mxu0 %v981
  %v983 = vpop.f32.mrf.mxu0
  %v984 = vadd.f32 %v913, %v983
  %v985 = vand.u32 %v647, 4294901760
  %986 = vmatmul.f32.gmra.mxu0 %v985
  %v987 = vpop.f32.mrf.mxu0
  %v988 = vadd.f32 %v919, %v987
  %v989 = vand.u32 %v650, 4294901760
  %990 = vmatmul.f32.gmra.mxu0 %v989
  %v991 = vpop.f32.mrf.mxu0
  %v992 = vadd.f32 %v925, %v991
  %v993 = vand.u32 %v653, 4294901760
  %994 = vmatmul.f32.gmra.mxu0 %v993
  %v995 = vpop.f32.mrf.mxu0
  %v996 = vadd.f32 %v931, %v995
  %997 = vdwg.mxu0
  %998 = vmatpush.msra.mxu0 0.0
  %999 = vmatpush.msra.mxu0 0.0
  %1000 = vmatpush.msra.mxu0 0.0
  %1001 = vmatpush.msra.mxu0 0.0
  %1002 = vmatpush.msra.mxu0 0.0
  %1003 = vmatpush.msra.mxu0 0.0
  %1004 = vmatpush.msra.mxu0 0.0
  %1005 = vmatpush.msra.mxu0 0.0
  %v1006 = vand.u32 %v32, 4294901760
  %1007 = vmatpush.msra.mxu0 %v1006
  %v1008 = vand.u32 %v31, 4294901760
  %1009 = vmatpush.msra.mxu0 %v1008
  %v1010 = vand.u32 %v30, 4294901760
  %1011 = vmatpush.msra.mxu0 %v1010
  %v1012 = vand.u32 %v29, 4294901760
  %1013 = vmatpush.msra.mxu0 %v1012
  %v1014 = vand.u32 %v28, 4294901760
  %1015 = vmatpush.msra.mxu0 %v1014
  %v1016 = vand.u32 %v27, 4294901760
  %1017 = vmatpush.msra.mxu0 %v1016
  %v1018 = vand.u32 %v26, 4294901760
  %1019 = vmatpush.msra.mxu0 %v1018
  %v1020 = vand.u32 %v25, 4294901760
  %1021 = vmatpush.msra.mxu0 %v1020
  %v1022 = vand.u32 %v638, 4294901760
  %1023 = vmatmul.f32.gmra.mxu0 %v1022
  %v1024 = vpop.f32.mrf.mxu0
  %v1025 = vadd.f32 %v976, %v1024
  %v1026 = vand.u32 %v641, 4294901760
  %1027 = vmatmul.f32.gmra.mxu0 %v1026
  %v1028 = vpop.f32.mrf.mxu0
  %v1029 = vadd.f32 %v980, %v1028
  %v1030 = vand.u32 %v644, 4294901760
  %1031 = vmatmul.f32.gmra.mxu0 %v1030
  %v1032 = vpop.f32.mrf.mxu0
  %v1033 = vadd.f32 %v984, %v1032
  %v1034 = vand.u32 %v647, 4294901760
  %1035 = vmatmul.f32.gmra.mxu0 %v1034
  %v1036 = vpop.f32.mrf.mxu0
  %v1037 = vadd.f32 %v988, %v1036
  %v1038 = vand.u32 %v650, 4294901760
  %1039 = vmatmul.f32.gmra.mxu0 %v1038
  %v1040 = vpop.f32.mrf.mxu0
  %v1041 = vadd.f32 %v992, %v1040
  %v1042 = vand.u32 %v653, 4294901760
  %1043 = vmatmul.f32.gmra.mxu0 %v1042
  %v1044 = vpop.f32.mrf.mxu0
  %v1045 = vadd.f32 %v996, %v1044
  %1046 = vdwg.mxu0
  %v1047 = vxor.u32 %v1025, 2147483648
  %v1048 = vxor.u32 %v1029, 2147483648
  %v1049 = vxor.u32 %v1033, 2147483648
  %v1050 = vxor.u32 %v1037, 2147483648
  %v1051 = vxor.u32 %v1041, 2147483648
  %v1052 = vxor.u32 %v1045, 2147483648
  %v1053 = vmul.f32 %v1047, 1.442695
  %v1054 = vpow.pop %v1053
  %v1055 = vmul.f32 %v1048, 1.442695
  %v1056 = vpow.pop %v1055
  %v1057 = vmul.f32 %v1049, 1.442695
  %v1058 = vpow.pop %v1057
  %v1059 = vmul.f32 %v1050, 1.442695
  %v1060 = vpow.pop %v1059
  %v1061 = vmul.f32 %v1051, 1.442695
  %v1062 = vpow.pop %v1061
  %v1063 = vmul.f32 %v1052, 1.442695
  %v1064 = vpow.pop %v1063
  %v1065 = vadd.f32 %v1054, 1.0
  %v1066 = vadd.f32 %v1056, 1.0
  %v1067 = vadd.f32 %v1058, 1.0
  %v1068 = vadd.f32 %v1060, 1.0
  %v1069 = vadd.f32 %v1062, 1.0
  %v1070 = vadd.f32 %v1064, 1.0
  %v1071 = vrcp.pop %v1065
  %v1072 = vmul.f32 %v1065, %v1071
  %v1073 = vsub.f32 1.0, %v1072
  %v1074 = vmul.f32 %v1071, %v1073
  %v1075 = vadd.f32 %v1071, %v1074
  %vm1076 = vweird.f32 %v1065
  %vm1077 = vweird.f32 %v1071
  %vm1078 = vmor %vm1076, %vm1077
  %v1079 = vsel %vm1078, %v1071, %v1075
  %v1080 = vand.u32 2147483647, %v1065
  %vm1081 = vcmp.eq.f32.partialorder %v1080, 8.507059e+37
  %v1082 = vand.u32 %v1065, 2147483648
  %v1083 = vor.u32 1.1754944e-38, %v1082
  %v1084 = vsel %vm1081, %v1083, %v1079
  %v1085 = vmul.f32 1.0, %v1084
  %v1086 = vrcp.pop %v1066
  %v1087 = vmul.f32 %v1066, %v1086
  %v1088 = vsub.f32 1.0, %v1087
  %v1089 = vmul.f32 %v1086, %v1088
  %v1090 = vadd.f32 %v1086, %v1089
  %vm1091 = vweird.f32 %v1066
  %vm1092 = vweird.f32 %v1086
  %vm1093 = vmor %vm1091, %vm1092
  %v1094 = vsel %vm1093, %v1086, %v1090
  %v1095 = vand.u32 2147483647, %v1066
  %vm1096 = vcmp.eq.f32.partialorder %v1095, 8.507059e+37
  %v1097 = vand.u32 %v1066, 2147483648
  %v1098 = vor.u32 1.1754944e-38, %v1097
  %v1099 = vsel %vm1096, %v1098, %v1094
  %v1100 = vmul.f32 1.0, %v1099
  %v1101 = vrcp.pop %v1067
  %v1102 = vmul.f32 %v1067, %v1101
  %v1103 = vsub.f32 1.0, %v1102
  %v1104 = vmul.f32 %v1101, %v1103
  %v1105 = vadd.f32 %v1101, %v1104
  %vm1106 = vweird.f32 %v1067
  %vm1107 = vweird.f32 %v1101
  %vm1108 = vmor %vm1106, %vm1107
  %v1109 = vsel %vm1108, %v1101, %v1105
  %v1110 = vand.u32 2147483647, %v1067
  %vm1111 = vcmp.eq.f32.partialorder %v1110, 8.507059e+37
  %v1112 = vand.u32 %v1067, 2147483648
  %v1113 = vor.u32 1.1754944e-38, %v1112
  %v1114 = vsel %vm1111, %v1113, %v1109
  %v1115 = vmul.f32 1.0, %v1114
  %v1116 = vrcp.pop %v1068
  %v1117 = vmul.f32 %v1068, %v1116
  %v1118 = vsub.f32 1.0, %v1117
  %v1119 = vmul.f32 %v1116, %v1118
  %v1120 = vadd.f32 %v1116, %v1119
  %vm1121 = vweird.f32 %v1068
  %vm1122 = vweird.f32 %v1116
  %vm1123 = vmor %vm1121, %vm1122
  %v1124 = vsel %vm1123, %v1116, %v1120
  %v1125 = vand.u32 2147483647, %v1068
  %vm1126 = vcmp.eq.f32.partialorder %v1125, 8.507059e+37
  %v1127 = vand.u32 %v1068, 2147483648
  %v1128 = vor.u32 1.1754944e-38, %v1127
  %v1129 = vsel %vm1126, %v1128, %v1124
  %v1130 = vmul.f32 1.0, %v1129
  %v1131 = vrcp.pop %v1069
  %v1132 = vmul.f32 %v1069, %v1131
  %v1133 = vsub.f32 1.0, %v1132
  %v1134 = vmul.f32 %v1131, %v1133
  %v1135 = vadd.f32 %v1131, %v1134
  %vm1136 = vweird.f32 %v1069
  %vm1137 = vweird.f32 %v1131
  %vm1138 = vmor %vm1136, %vm1137
  %v1139 = vsel %vm1138, %v1131, %v1135
  %v1140 = vand.u32 2147483647, %v1069
  %vm1141 = vcmp.eq.f32.partialorder %v1140, 8.507059e+37
  %v1142 = vand.u32 %v1069, 2147483648
  %v1143 = vor.u32 1.1754944e-38, %v1142
  %v1144 = vsel %vm1141, %v1143, %v1139
  %v1145 = vmul.f32 1.0, %v1144
  %v1146 = vrcp.pop %v1070
  %v1147 = vmul.f32 %v1070, %v1146
  %v1148 = vsub.f32 1.0, %v1147
  %v1149 = vmul.f32 %v1146, %v1148
  %v1150 = vadd.f32 %v1146, %v1149
  %vm1151 = vweird.f32 %v1070
  %vm1152 = vweird.f32 %v1146
  %vm1153 = vmor %vm1151, %vm1152
  %v1154 = vsel %vm1153, %v1146, %v1150
  %v1155 = vand.u32 2147483647, %v1070
  %vm1156 = vcmp.eq.f32.partialorder %v1155, 8.507059e+37
  %v1157 = vand.u32 %v1070, 2147483648
  %v1158 = vor.u32 1.1754944e-38, %v1157
  %v1159 = vsel %vm1156, %v1158, %v1154
  %v1160 = vmul.f32 1.0, %v1159
  %v1161 = vtanh.pop %v1025
  %v1162 = vtanh.pop %v1029
  %v1163 = vtanh.pop %v1033
  %v1164 = vtanh.pop %v1037
  %v1165 = vtanh.pop %v1041
  %v1166 = vtanh.pop %v1045
  %v1167 = vsub.f32 1.0, %v1085
  %v1168 = vsub.f32 1.0, %v1100
  %v1169 = vsub.f32 1.0, %v1115
  %v1170 = vsub.f32 1.0, %v1130
  %v1171 = vsub.f32 1.0, %v1145
  %v1172 = vsub.f32 1.0, %v1160
  %1179 = vrot.lane.b32.xlu0 %v1161, 96
  %v1180 = vpop.permute.xlu0 %1179
  %1181 = vrot.lane.b32.xlu0 %v1162, 96
  %v1182 = vpop.permute.xlu0 %1181
  %1183 = vrot.lane.b32.xlu0 %v1163, 96
  %v1184 = vpop.permute.xlu0 %1183
  %1185 = vrot.lane.b32.xlu0 %v1164, 96
  %v1186 = vpop.permute.xlu0 %1185
  %1187 = vrot.lane.b32.xlu0 %v1165, 96
  %v1188 = vpop.permute.xlu0 %1187
  %1189 = vrot.lane.b32.xlu0 %v1166, 96
  %v1190 = vpop.permute.xlu0 %1189
  %v1197 = vmul.f32 %v1167, %v1180
  %v1198 = vmul.f32 %v1168, %v1182
  %v1199 = vmul.f32 %v1169, %v1184
  %v1200 = vmul.f32 %v1170, %v1186
  %v1201 = vmul.f32 %v1171, %v1188
  %v1202 = vmul.f32 %v1172, %v1190
  %v1203 = vmax.f32 %v1197, 0.0
  %v1204 = vmax.f32 %v1198, 0.0
  %v1205 = vmax.f32 %v1199, 0.0
  %v1206 = vmax.f32 %v1200, 0.0
  %v1207 = vmax.f32 %v1201, 0.0
  %v1208 = vmax.f32 %v1202, 0.0
  %vm1209 = vcmask 261120
  %v1210 = vsel %vm1209, %v1203, 0.0
  %v1211 = vsel %vm1209, %v1204, 0.0
  %v1212 = vadd.f32 %v1210, %v1211
  %v1213 = vrot.slane %v1212, 4
  %v1214 = vadd.f32 %v1212, %v1213
  %v1215 = vrot.slane %v1214, 2
  %v1216 = vadd.f32 %v1214, %v1215
  %v1217 = vrot.slane %v1216, 1
  %v1218 = vadd.f32 %v1216, %v1217
  %v1219 = vmul.f32 %v1218, %v45
  %v1220 = vsel %vm1209, %v1205, 0.0
  %v1221 = vsel %vm1209, %v1206, 0.0
  %v1222 = vadd.f32 %v1220, %v1221
  %v1223 = vrot.slane %v1222, 4
  %v1224 = vadd.f32 %v1222, %v1223
  %v1225 = vrot.slane %v1224, 2
  %v1226 = vadd.f32 %v1224, %v1225
  %v1227 = vrot.slane %v1226, 1
  %v1228 = vadd.f32 %v1226, %v1227
  %v1229 = vmul.f32 %v1228, %v45
  %v1231 = vrot.slane %v1229, 2
  %v1233 = vadd.f32 %v1219, %v1231
  %v1234 = vsel %vm1209, %v1207, 0.0
  %v1235 = vsel %vm1209, %v1208, 0.0
  %v1236 = vadd.f32 %v1234, %v1235
  %v1237 = vrot.slane %v1236, 4
  %v1238 = vadd.f32 %v1236, %v1237
  %v1239 = vrot.slane %v1238, 2
  %v1240 = vadd.f32 %v1238, %v1239
  %v1241 = vrot.slane %v1240, 1
  %v1242 = vadd.f32 %v1240, %v1241
  %v1243 = vmul.f32 %v1242, %v45
  %v1245 = vrot.slane %v1243, 4
  %v1247 = vadd.f32 %v1233, %v1245
  %vm1248 = vcmask 254976
  %v1249 = vsel %vm1248, %v1247, 0.0
  %1250 = vadd.xlane.f32.xlu0 %v1249
  %v1251 = vpop.xlane.xlu0 %1250
  %v1252 = vmul.f32 %v1251, 0.06666667
  %v1254 = vrot.slane %v45, 6
  %v1256 = vadd.f32 %v1252, %v1254
  %vm1257 = vcmask 1024
  %1258 = vst.msk [vmem:[%s2] sm:$0x3] %vm1257, %v1256
  // Predicated region
  $region10: #{stgcn_pallas.1} parent=0 // pred_check
    _
  $region11: #{stgcn_pallas.1} parent=0 // pred_check_branch
    %1260 = sbr.rel (0) target = $region13
  $region12: #{stgcn_pallas.1} parent=0 // pred_region
    _
  $region13: #{stgcn_pallas.1} parent=0 // pred_fallthru
    _
  // Predicated region
  $region14: #{stgcn_pallas.1} parent=0 // pred_check
    _
  $region15: #{stgcn_pallas.1} parent=0 // pred_check_branch
    %1262 = sbr.rel (0) target = $region17
  $region16: #{stgcn_pallas.1} parent=0 // pred_region
    _
  $region17: #{stgcn_pallas.1} parent=0 // pred_fallthru
    _

</llo_original>
